<compile_context>
chip_gen: v6e
topology: v6e:2x2x1
jax: 0.10.0
libtpu: 0.0.40
codegen_flags: <defaults>
</compile_context>

<pallas_src>
import functools

import jax
import jax.numpy as jnp
from jax.experimental import pallas as pl
from jax.experimental.pallas import tpu as pltpu


def _perceptron_kernel(x_ref, w_ref, b_ref, o_ref, *, apply_sigmoid: bool):
    # x_ref: (TILE_B, F) VMEM   w_ref: (1, F) VMEM (resident)   b_ref: (1,) SMEM
    # o_ref: (1, TILE_B) VMEM   (lane-dense output row)
    # Contract the F axis of both operands: (1, F) x (TILE_B, F) -> (1, TILE_B).
    # Output lands directly lane-dense, so no (TILE_B, 1) -> (1, TILE_B) relayout is needed.
    y = jax.lax.dot_general(
        w_ref[...], x_ref[...],
        dimension_numbers=(((1,), (1,)), ((), ())),
        preferred_element_type=jnp.float32,
    )
    y = y + b_ref[0]                      # scalar bias read from SMEM
    if apply_sigmoid:
        y = jax.nn.sigmoid(y)             # EUP slot; free under the x DMA
    o_ref[...] = y.astype(o_ref.dtype)


def perceptron_forward(x, w, b, apply_sigmoid=False, *, tile_b=None):
    """Forward pass of Perceptron.

    x: (B, F) float32
    w: (1, F) float32   (PyTorch nn.Linear weight layout: (out_features, in_features))
    b: (1,)   float32
    Returns shape (B,) for B > 1, scalar () for B == 1 (matches torch .squeeze()).
    """
    B, F = x.shape
    x = jnp.asarray(x, jnp.float32)
    w2 = jnp.asarray(w, jnp.float32).reshape(1, F)
    b1 = jnp.asarray(b, jnp.float32).reshape(1)

    # --- tile selection: biggest batch tile whose double-buffered x block fits comfortably
    #     in the scoped VMEM budget on every generation.
    if tile_b is None:
        x_budget = 20 * 1024 * 1024                       # bytes for 2 x (TILE_B, F) f32 buffers
        rows = max(1, x_budget // (2 * F * 4))
        tile_b = int(min(B, rows, 2048))
    if tile_b >= B:
        tile_b = B                                        # full-array block: no alignment needed
    else:
        tile_b = max(128, (tile_b // 128) * 128)          # lane-dense out block needs % 128 == 0
    # TODO(synk): for very large num_features (>= ~64K) add a K grid axis with a VMEM f32
    # accumulator (init/finalize via pl.when) so the per-block footprint stays bounded.

    # Pad batch to a multiple of tile_b so every block is full (tail sliced off below).
    pad = (-B) % tile_b
    if pad:
        x = jnp.pad(x, ((0, pad), (0, 0)))
    Bp = B + pad
    grid = (Bp // tile_b,)

    # Scoped VMEM: double-buffered x + (sublane-padded) w and out blocks + slack.
    vmem_bytes = (2 * tile_b * F + 2 * 8 * F + 2 * 8 * tile_b) * 4 + (2 << 20)
    vmem_limit = int(min(max(vmem_bytes, 8 << 20), 48 << 20))   # stay <= ~48 MiB for v7x

    kernel = functools.partial(_perceptron_kernel, apply_sigmoid=apply_sigmoid)
    out = pl.pallas_call(
        kernel,
        out_shape=jax.ShapeDtypeStruct((1, Bp), jnp.float32),
        grid_spec=pltpu.PrefetchScalarGridSpec(
            num_scalar_prefetch=0,
            grid=grid,
            in_specs=[
                pl.BlockSpec((tile_b, F), lambda i: (i, 0)),          # streamed x tile
                pl.BlockSpec((1, F), lambda i: (0, 0)),               # VMEM-resident weight
                pl.BlockSpec(memory_space=pltpu.MemorySpace.SMEM),    # scalar bias in SMEM
            ],
            out_specs=pl.BlockSpec((1, tile_b), lambda i: (0, i)),    # lane-dense output row
        ),
        compiler_params=pltpu.CompilerParams(
            dimension_semantics=("parallel",),   # no reduction axis; v7x shards across both TCs
            vmem_limit_bytes=vmem_limit,
        ),
        cost_estimate=pl.CostEstimate(
            flops=2 * B * F,
            transcendentals=B if apply_sigmoid else 0,
            bytes_accessed=4 * (B * F + F + B + 1),
        ),
    )(x, w2, b1)

    y = out[0, :B]
    # torch .squeeze() drops all size-1 dims: (B, 1) -> (B,) and (1, 1) -> () when B == 1.
    return jnp.squeeze(y)


if __name__ == "__main__":
    # Small deterministic setup consistent with the module: Linear(num_features, 1).
    batch = 256
    num_features = 128

    key = jax.random.PRNGKey(0)
    k_x, k_w, k_b = jax.random.split(key, 3)

    x = jax.random.normal(k_x, (batch, num_features), dtype=jnp.float32)
    # Deterministic synthetic parameters in PyTorch nn.Linear layout: weight (1, F), bias (1,).
    w = jax.random.normal(k_w, (1, num_features), dtype=jnp.float32) * 0.1
    b = jax.random.normal(k_b, (1,), dtype=jnp.float32) * 0.1

    # Force the tiled/pipelined path even at this small demo size (grid of 2 steps).
    y = perceptron_forward(x, w, b, apply_sigmoid=False, tile_b=128)
    y_sig = perceptron_forward(x, w, b, apply_sigmoid=True, tile_b=128)
    jax.block_until_ready(y)
    jax.block_until_ready(y_sig)

    # Sanity check against plain-JAX reference.
    y_ref = x @ w[0] + b[0]
    assert y.shape == (batch,)
    assert jnp.allclose(y, y_ref, atol=1e-4, rtol=1e-4), "linear path mismatch"
    assert jnp.allclose(y_sig, jax.nn.sigmoid(y_ref), atol=1e-4, rtol=1e-4), "sigmoid path mismatch"

    print("KERNEL_OK")
</pallas_src>

<mosaic_0001>
module attributes {stable_mosaic.version = 11 : i64} {
  func.func @_perceptron_kernel(%arg0: i32, %arg1: memref<128x128xf32, #tpu.memory_space<vmem>>, %arg2: memref<1x128xf32, #tpu.memory_space<vmem>>, %arg3: memref<1xf32, #tpu.memory_space<smem>>, %arg4: memref<1x128xf32, #tpu.memory_space<vmem>>) attributes {dimension_semantics = [#tpu.dimension_semantics<parallel>], iteration_bounds = array<i64: 2>, scalar_prefetch = 0 : i64, scratch_operands = 0 : i64, tpu.core_type = #tpu.core_type<tc>, window_params = [{transform_indices = @transform_0, window_bounds = array<i64: 128, 128>}, {pipeline_mode = #tpu.pipeline_mode<synchronous>, transform_indices = @transform_1, window_bounds = array<i64: 1, 128>}, {transform_indices = @transform_2, window_bounds = array<i64: 1>}, {transform_indices = @transform_3, window_bounds = array<i64: 1, 128>}]} {
    %c0 = arith.constant 0 : index
    %c0_0 = arith.constant 0 : index
    %0 = vector.load %arg2[%c0, %c0_0] : memref<1x128xf32, #tpu.memory_space<vmem>>, vector<1x128xf32>
    %c0_1 = arith.constant 0 : index
    %c0_2 = arith.constant 0 : index
    %1 = vector.load %arg1[%c0_1, %c0_2] : memref<128x128xf32, #tpu.memory_space<vmem>>, vector<128x128xf32>
    %cst = arith.constant dense<0.000000e+00> : vector<1x128xf32>
    %2 = tpu.matmul %0, %1, %cst {dimension_numbers = #tpu.dot_dimension_numbers<[1], [1], [0], [0], [0, 0, 1, 0], [], []>} : vector<1x128xf32>, vector<128x128xf32>, vector<1x128xf32> -> vector<1x128xf32>
    %c0_3 = arith.constant 0 : index
    %3 = memref.load %arg3[%c0_3] : memref<1xf32, #tpu.memory_space<smem>>
    %4 = vector.broadcast %3 : f32 to vector<1x128xf32>
    %5 = arith.addf %2, %4 : vector<1x128xf32>
    %c0_4 = arith.constant 0 : index
    %c0_5 = arith.constant 0 : index
    %6 = vector.load %arg4[%c0_4, %c0_5] : memref<1x128xf32, #tpu.memory_space<vmem>>, vector<1x128xf32>
    tpu.vector_store %arg4[%c0_4, %c0_5], %5 {strides = array<i32>} : memref<1x128xf32, #tpu.memory_space<vmem>>, vector<1x128xf32>,
    return
  }
  func.func @transform_0(%arg0: i32) -> (i32, i32) {
    %c0_i32 = arith.constant 0 : i32
    %c0_i32_0 = arith.constant 0 : i32
    return %arg0, %c0_i32 : i32, i32
  }
  func.func @transform_1(%arg0: i32) -> (i32, i32) {
    %c0_i32 = arith.constant 0 : i32
    %c0_i32_0 = arith.constant 0 : i32
    %c0_i32_1 = arith.constant 0 : i32
    return %c0_i32, %c0_i32_0 : i32, i32
  }
  func.func @transform_2(%arg0: i32) -> i32 {
    %c0_i32 = arith.constant 0 : i32
    %c0_i32_0 = arith.constant 0 : i32
    return %c0_i32 : i32
  }
  func.func @transform_3(%arg0: i32) -> (i32, i32) {
    %c0_i32 = arith.constant 0 : i32
    %c0_i32_0 = arith.constant 0 : i32
    return %c0_i32, %arg0 : i32, i32
  }
}

</mosaic_0001>

<llo_original>
// kernel: tpu_custom_call.1
$region0: #{tpu_custom_call.1}
  #allocation0 [shape = 'u32[]', space=smem, size = 0x4, offset = 0x4, fixed_abs, tag = 'smem constant byte address 0x4 - core index']
  #allocation1 [shape = 'u32[144,128]{1,0:T(1,128)}', space=vmem, size = 0x12000, scoped, tag = 'internal scratch']
  #allocation2 [shape = 'f32[1]{0:T(128)S(6)}', space=smem, size = 0x200, scoped, tag = 'scoped memory for tpu_custom_call.1']
  %s0 = inlined_call_operand.hbm [shape: f32[256,128], index: 0, kind: input, shape index: {}]
  %s1 = inlined_call_operand.vmem [shape: f32[1,128], index: 1, kind: input, shape index: {}]
  %s2 = inlined_call_operand.<no memory space> [shape: f32[1], index: 2, kind: input, shape index: {}]
  %s3 = inlined_call_operand.hbm [shape: f32[1,256], index: 3, kind: output, shape index: {}]
  %s4 = sld [smem:[#allocation0]]
  $region49: #{tpu_custom_call.1} parent=0
    _
  %s6 = ssub.s32 1, %s4
  %s7 = scalar_select 0, %s6, %s4
  %8 = sst [smem:[#allocation2]] %s2
  $region1: #{tpu_custom_call.1} parent=0
    #allocation3 [shape = 'u8[131072]{0}', space=vmem, size = 0x20000, scoped, tag = 'input window, operand 0']
    #allocation4 [shape = 's32[2]{0}', space=sflag, size = 0x8, scoped, tag = 'scoped memory for tpu_custom_call.1']
    #allocation5 [shape = 's32[2]{0}', space=sflag, size = 0x8, scoped, tag = 'scoped memory for tpu_custom_call.1']
    #allocation6 [shape = 'u8[1024]{0}', space=vmem, size = 0x400, scoped, tag = 'output window, operand 0']
    %9 = vsyncpa [#allocation4], 0
    %s10 = scalar_lea.sflag [#allocation4], 1
    %11 = vsyncpa %s10, 0
    %12 = vsyncpa [#allocation5], 0
    %s13 = scalar_lea.sflag [#allocation5], 1
    %14 = vsyncpa %s13, 0
    loop: start=0, step=1, limit=4
    $region2: #{tpu_custom_call.1} parent=1 // loop_pre_header
      _
    $region3: #{tpu_custom_call.1} parent=1 // loop_header
      %s16 = sphi 0, %s20
      %p17 = scmp.ge.s32.totalorder %s16, 4
      %s26 = sphi 0, %s28
      %s29 = sphi 0, %s26
      %s30 = sphi 0, %s29
      %s46 = sphi 0, %s30
      %s50 = sphi 0, %s50
      %s52 = sphi 0, %s50
      %s53 = sphi 0, %s52
      %s67 = sphi 0, %s53
      %s71 = sphi 0, %s71
      %s73 = sphi 0, %s71
      %s74 = sphi 0, %s73
      %s88 = sphi 0, %s74
      %s94 = sphi 0, %s96
      %s97 = sphi 0, %s94
      %s98 = sphi 0, %s97
      %s114 = sphi 0, %s98
    $region4: #{tpu_custom_call.1} parent=1 // loop_header_branch
      %19 = sbr.rel (%p17) target = $region8
    $region5: #{tpu_custom_call.1} parent=1 // loop_body
      %s21 = ssub.s32 %s16, 1
      %s22 = ssub.s32 %s16, 2
      %s23 = sadd.s32 %s16, 1
      %s24 = ssub.s32 %s16, %s23
      %p25 = scmp.eq.s32.totalorder %s24, 0
      %s27 = sadd.s32 %s26, 1
      %s28 = scalar_select %p25, %s26, %s27
      %p31 = pneg %p25
      %p32 = scmp.eq.s32.totalorder %s16, 1
      %p33 = por %p31, %p32
      %p34 = scmp.ne.s32.totalorder %s26, %s29
      %p35 = scmp.eq.s32.totalorder %s16, 0
      %p36 = por %p34, %p35
      %p37 = scmp.ne.s32.totalorder %s26, %s29
      %p38 = scmp.eq.s32.totalorder %s21, 1
      %p39 = por %p37, %p38
      %p40 = scmp.ne.s32.totalorder %s29, %s30
      %p41 = scmp.eq.s32.totalorder %s21, 0
      %p42 = por %p40, %p41
      %p43 = scmp.ne.s32.totalorder %s29, %s30
      %p44 = scmp.eq.s32.totalorder %s22, 1
      %p45 = por %p43, %p44
      %p47 = scmp.ne.s32.totalorder %s30, %s46
      %p48 = scmp.eq.s32.totalorder %s22, 0
      %p49 = por %p47, %p48
      %s51 = sadd.s32 %s50, 1
      %p54 = scmp.eq.s32.totalorder %s16, 1
      %p55 = scmp.ne.s32.totalorder %s50, %s52
      %p56 = scmp.eq.s32.totalorder %s16, 0
      %p57 = por %p55, %p56
      %p58 = scmp.ne.s32.totalorder %s50, %s52
      %p59 = scmp.eq.s32.totalorder %s21, 1
      %p60 = por %p58, %p59
      %p61 = scmp.ne.s32.totalorder %s52, %s53
      %p62 = scmp.eq.s32.totalorder %s21, 0
      %p63 = por %p61, %p62
      %p64 = scmp.ne.s32.totalorder %s52, %s53
      %p65 = scmp.eq.s32.totalorder %s22, 1
      %p66 = por %p64, %p65
      %p68 = scmp.ne.s32.totalorder %s53, %s67
      %p69 = scmp.eq.s32.totalorder %s22, 0
      %p70 = por %p68, %p69
      %s72 = sadd.s32 %s71, 1
      %p75 = scmp.eq.s32.totalorder %s16, 1
      %p76 = scmp.ne.s32.totalorder %s71, %s73
      %p77 = scmp.eq.s32.totalorder %s16, 0
      %p78 = por %p76, %p77
      %p79 = scmp.ne.s32.totalorder %s71, %s73
      %p80 = scmp.eq.s32.totalorder %s21, 1
      %p81 = por %p79, %p80
      %p82 = scmp.ne.s32.totalorder %s73, %s74
      %p83 = scmp.eq.s32.totalorder %s21, 0
      %p84 = por %p82, %p83
      %p85 = scmp.ne.s32.totalorder %s73, %s74
      %p86 = scmp.eq.s32.totalorder %s22, 1
      %p87 = por %p85, %p86
      %p89 = scmp.ne.s32.totalorder %s74, %s88
      %p90 = scmp.eq.s32.totalorder %s22, 0
      %p91 = por %p89, %p90
      %s92 = ssub.s32 %s16, %s23
      %p93 = scmp.eq.s32.totalorder %s92, 0
      %s95 = sadd.s32 %s94, 1
      %s96 = scalar_select %p93, %s94, %s95
      %p99 = pneg %p93
      %p100 = scmp.eq.s32.totalorder %s16, 1
      %p101 = por %p99, %p100
      %p102 = scmp.ne.s32.totalorder %s94, %s97
      %p103 = scmp.eq.s32.totalorder %s16, 0
      %p104 = por %p102, %p103
      %p105 = scmp.ne.s32.totalorder %s94, %s97
      %p106 = scmp.eq.s32.totalorder %s21, 1
      %p107 = por %p105, %p106
      %p108 = scmp.ne.s32.totalorder %s97, %s98
      %p109 = scmp.eq.s32.totalorder %s21, 0
      %p110 = por %p108, %p109
      %p111 = scmp.ne.s32.totalorder %s97, %s98
      %p112 = scmp.eq.s32.totalorder %s22, 1
      %p113 = por %p111, %p112
      %p115 = scmp.ne.s32.totalorder %s98, %s114
      %p116 = scmp.eq.s32.totalorder %s22, 0
      %p117 = por %p115, %p116
      %p118 = scmp.le.s32.totalorder 1, %s16
      %p119 = scmp.lt.s32.totalorder %s16, 3
      %p120 = pnand %p118, %p119
      %p121 = pneg %p120
      // Predicated region
      $region9: #{tpu_custom_call.1} parent=5 // pred_check
        _
      $region10: #{tpu_custom_call.1} parent=5 // pred_check_branch
        %123 = sbr.rel (%p120) target = $region12
      $region11: #{tpu_custom_call.1} parent=5 // pred_region
        %s124 = ssub.s32 %s16, 1
        // Predicated region
        $region13: #{tpu_custom_call.1} parent=11 // pred_check
          %p125 = pneg %p63
        $region14: #{tpu_custom_call.1} parent=11 // pred_check_branch
          %127 = sbr.rel (%p125) target = $region16
        $region15: #{tpu_custom_call.1} parent=11 // pred_region
          _
        $region16: #{tpu_custom_call.1} parent=11 // pred_fallthru
          _
        // Predicated region
        $region17: #{tpu_custom_call.1} parent=11 // pred_check
          %p128 = pneg %p84
        $region18: #{tpu_custom_call.1} parent=11 // pred_check_branch
          %130 = sbr.rel (%p128) target = $region20
        $region19: #{tpu_custom_call.1} parent=11 // pred_region
          _
        $region20: #{tpu_custom_call.1} parent=11 // pred_fallthru
          _
      $region12: #{tpu_custom_call.1} parent=5 // pred_fallthru
        _
      %p131 = scmp.lt.s32.totalorder %s16, 2
      // Predicated region
      $region21: #{tpu_custom_call.1} parent=5 // pred_check
        %p132 = pneg %p131
      $region22: #{tpu_custom_call.1} parent=5 // pred_check_branch
        %134 = sbr.rel (%p132) target = $region24
      $region23: #{tpu_custom_call.1} parent=5 // pred_region
        // Predicated region
        $region25: #{tpu_custom_call.1} parent=23 // pred_check
          %p135 = pneg %p36
        $region26: #{tpu_custom_call.1} parent=23 // pred_check_branch
          %137 = sbr.rel (%p135) target = $region28
        $region27: #{tpu_custom_call.1} parent=23 // pred_region
          %s138 = sand.u32 %s26, 1
          %s139 = scalar_lea.sflag [#allocation4], %s138
          %s140 = sand.u32 %s26, 1
          %s141 = smul.addr %s140, 128
          %s142 = scalar_lea.vmem [#allocation3], %s141
          %s143 = smul.u32 16, %s16
          %s145 = ssub.s32 2048, 2048
          %146 = vsyncadd %s139, %s145
          %s147 = smul.addr %s143, 128
          %s148 = scalar_lea.hbm %s0, %s147
          %s149 = sshll.u32 %s142, 4
          %s150 = int_to_ptr.vmem [resolvable:$true] %s149
          %155 = dma.hbm_to_vmem [thread:$0]  %s148, 2048, %s150, %s139, 128, 128, 8
        $region28: #{tpu_custom_call.1} parent=23 // pred_fallthru
          _
      $region24: #{tpu_custom_call.1} parent=5 // pred_fallthru
        _
      %p156 = scmp.le.s32.totalorder 1, %s16
      %p157 = scmp.lt.s32.totalorder %s16, 3
      %p158 = pnand %p156, %p157
      %p159 = pneg %p158
      // Predicated region
      $region29: #{tpu_custom_call.1} parent=5 // pred_check
        _
      $region30: #{tpu_custom_call.1} parent=5 // pred_check_branch
        %161 = sbr.rel (%p158) target = $region32
      $region31: #{tpu_custom_call.1} parent=5 // pred_region
        %s162 = ssub.s32 %s16, 1
        %s163 = sand.u32 %s29, 1
        %s164 = scalar_lea.sflag [#allocation4], %s163
        %s165 = sand.u32 %s29, 1
        %s166 = smul.addr %s165, 128
        %s167 = scalar_lea.vmem [#allocation3], %s166
        // Predicated region
        $region33: #{tpu_custom_call.1} parent=31 // pred_check
          %p168 = pneg %p42
        $region34: #{tpu_custom_call.1} parent=31 // pred_check_branch
          %170 = sbr.rel (%p168) target = $region36
        $region35: #{tpu_custom_call.1} parent=31 // pred_region
          %171 = dma.done %s164, 2048
        $region36: #{tpu_custom_call.1} parent=31 // pred_fallthru
          _
        %s172 = sand.u32 %s29, 1
        %s173 = scalar_lea.sflag [#allocation4], %s172
        %s174 = sand.u32 %s29, 1
        %s175 = smul.addr %s174, 128
        %s176 = scalar_lea.vmem [#allocation3], %s175
        %p177 = pneg %p42
        %p178 = pneg %p39
        %p179 = pneg %p63
        %p180 = pneg %p60
        %p181 = pneg %p84
        %p182 = pneg %p81
        %p183 = pneg %p110
        %p184 = pneg %p107
        %s185 = sand.u32 %s97, 1
        %s186 = scalar_lea.sflag [#allocation5], %s185
        %s187 = sand.u32 %s97, 1
        %s188 = scalar_lea.vmem [#allocation6], %s187
        %s189 = smul.u32 16, %s21
        %v190 = vld [vmem:[%s1] sm:$0x1]
        %v191 = vld [vmem:[%s167] sm:$0xff]
        %v192 = vld [vmem:[%s167 + $0x8] sm:$0xff]
        %v193 = vld [vmem:[%s167 + $0x10] sm:$0xff]
        %v194 = vld [vmem:[%s167 + $0x18] sm:$0xff]
        %v195 = vld [vmem:[%s167 + $0x20] sm:$0xff]
        %v196 = vld [vmem:[%s167 + $0x28] sm:$0xff]
        %v197 = vld [vmem:[%s167 + $0x30] sm:$0xff]
        %v198 = vld [vmem:[%s167 + $0x38] sm:$0xff]
        %v199 = vld [vmem:[%s167 + $0x40] sm:$0xff]
        %v200 = vld [vmem:[%s167 + $0x48] sm:$0xff]
        %v201 = vld [vmem:[%s167 + $0x50] sm:$0xff]
        %v202 = vld [vmem:[%s167 + $0x58] sm:$0xff]
        %v203 = vld [vmem:[%s167 + $0x60] sm:$0xff]
        %v204 = vld [vmem:[%s167 + $0x68] sm:$0xff]
        %v205 = vld [vmem:[%s167 + $0x70] sm:$0xff]
        %v206 = vld [vmem:[%s167 + $0x78] sm:$0xff]
        %s207 = sld [smem:[#allocation2]]
        %v208 = vstv %s207
        %209 = vmatprep.subr.mxu0 0.0
        %210 = vmatpush1.xpose.msra.mxu0 %v206
        %211 = vmatprep.subr.mxu0 0.0
        %212 = vmatpush1.xpose.msra.mxu0 %v205
        %213 = vmatprep.subr.mxu0 0.0
        %214 = vmatpush1.xpose.msra.mxu0 %v204
        %215 = vmatprep.subr.mxu0 0.0
        %216 = vmatpush1.xpose.msra.mxu0 %v203
        %217 = vmatprep.subr.mxu0 0.0
        %218 = vmatpush1.xpose.msra.mxu0 %v202
        %219 = vmatprep.subr.mxu0 0.0
        %220 = vmatpush1.xpose.msra.mxu0 %v201
        %221 = vmatprep.subr.mxu0 0.0
        %222 = vmatpush1.xpose.msra.mxu0 %v200
        %223 = vmatprep.subr.mxu0 0.0
        %224 = vmatpush1.xpose.msra.mxu0 %v199
        %225 = vmatprep.subr.mxu0 0.0
        %226 = vmatpush1.xpose.msra.mxu0 %v198
        %227 = vmatprep.subr.mxu0 0.0
        %228 = vmatpush1.xpose.msra.mxu0 %v197
        %229 = vmatprep.subr.mxu0 0.0
        %230 = vmatpush1.xpose.msra.mxu0 %v196
        %231 = vmatprep.subr.mxu0 0.0
        %232 = vmatpush1.xpose.msra.mxu0 %v195
        %233 = vmatprep.subr.mxu0 0.0
        %234 = vmatpush1.xpose.msra.mxu0 %v194
        %235 = vmatprep.subr.mxu0 0.0
        %236 = vmatpush1.xpose.msra.mxu0 %v193
        %237 = vmatprep.subr.mxu0 0.0
        %238 = vmatpush1.xpose.msra.mxu0 %v192
        %239 = vmatprep.subr.mxu0 0.0
        %240 = vmatpush1.xpose.msra.mxu0 %v191
        %241 = vmatprep.subr.mxu0 0.0
        %242 = vmatpush2.xpose.msra.mxu0 0.0
        %243 = vmatprep.subr.mxu0 0.0
        %244 = vmatpush2.xpose.msra.mxu0 0.0
        %245 = vmatprep.subr.mxu0 0.0
        %246 = vmatpush2.xpose.msra.mxu0 0.0
        %247 = vmatprep.subr.mxu0 0.0
        %248 = vmatpush2.xpose.msra.mxu0 0.0
        %249 = vmatprep.subr.mxu0 0.0
        %250 = vmatpush2.xpose.msra.mxu0 0.0
        %251 = vmatprep.subr.mxu0 0.0
        %252 = vmatpush2.xpose.msra.mxu0 0.0
        %253 = vmatprep.subr.mxu0 0.0
        %254 = vmatpush2.xpose.msra.mxu0 0.0
        %255 = vmatprep.subr.mxu0 0.0
        %256 = vmatpush2.xpose.msra.mxu0 0.0
        %257 = vmatprep.subr.mxu0 0.0
        %258 = vmatpush2.xpose.msra.mxu0 0.0
        %259 = vmatprep.subr.mxu0 0.0
        %260 = vmatpush2.xpose.msra.mxu0 0.0
        %261 = vmatprep.subr.mxu0 0.0
        %262 = vmatpush2.xpose.msra.mxu0 0.0
        %263 = vmatprep.subr.mxu0 0.0
        %264 = vmatpush2.xpose.msra.mxu0 0.0
        %265 = vmatprep.subr.mxu0 0.0
        %266 = vmatpush2.xpose.msra.mxu0 0.0
        %267 = vmatprep.subr.mxu0 0.0
        %268 = vmatpush2.xpose.msra.mxu0 0.0
        %269 = vmatprep.subr.mxu0 0.0
        %270 = vmatpush2.xpose.msra.mxu0 0.0
        %271 = vmatprep.subr.mxu0 0.0
        %272 = vmatpush2.xpose.msra.mxu0 0.0
        %273 = vmatprep.mubr.f32.mxu0 0.0
        %274 = vmatmul.mubr.f32.gmra.mxu0 %v190
        %v275 = vpop.f32.mrf.mxu0
        %v276 = vadd.f32 %v208, %v275
        %v277 = vpop.f32.mrf.mxu0
        %278 = vdwg.mxu0
        %279 = vst [vmem:[%s188] sm:$0x1] %v276
        %s280 = sand.u32 %s97, 1
        %s281 = scalar_lea.sflag [#allocation5], %s280
        %s282 = sand.u32 %s97, 1
        %s283 = scalar_lea.vmem [#allocation6], %s282
        // Predicated region
        $region37: #{tpu_custom_call.1} parent=31 // pred_check
          %p284 = pneg %p107
        $region38: #{tpu_custom_call.1} parent=31 // pred_check_branch
          %286 = sbr.rel (%p284) target = $region40
        $region39: #{tpu_custom_call.1} parent=31 // pred_region
          %s288 = ssub.s32 16, 16
          %289 = vsyncadd %s281, %s288
          %s290 = smul.addr %s21, 16
          %s291 = scalar_lea.hbm %s3, %s290
          %s293 = sshll.u32 %s283, 4
          %s294 = int_to_ptr.vmem [resolvable:$true] %s293
          %296 = dma.vmem_to_hbm [thread:$0]  %s294, 16, %s291, %s281
        $region40: #{tpu_custom_call.1} parent=31 // pred_fallthru
          _
      $region32: #{tpu_custom_call.1} parent=5 // pred_fallthru
        _
      %p297 = scmp.le.s32.totalorder 2, %s16
      // Predicated region
      $region41: #{tpu_custom_call.1} parent=5 // pred_check
        %p298 = pneg %p297
      $region42: #{tpu_custom_call.1} parent=5 // pred_check_branch
        %300 = sbr.rel (%p298) target = $region44
      $region43: #{tpu_custom_call.1} parent=5 // pred_region
        %s301 = ssub.s32 %s16, 2
        // Predicated region
        $region45: #{tpu_custom_call.1} parent=43 // pred_check
          %p302 = pneg %p113
        $region46: #{tpu_custom_call.1} parent=43 // pred_check_branch
          %304 = sbr.rel (%p302) target = $region48
        $region47: #{tpu_custom_call.1} parent=43 // pred_region
          %s305 = sand.u32 %s98, 1
          %s306 = scalar_lea.sflag [#allocation5], %s305
          %s307 = sand.u32 %s98, 1
          %s308 = scalar_lea.vmem [#allocation6], %s307
          %309 = dma.done %s306, 16
        $region48: #{tpu_custom_call.1} parent=43 // pred_fallthru
          _
      $region44: #{tpu_custom_call.1} parent=5 // pred_fallthru
        _
    $region6: #{tpu_custom_call.1} parent=1 // loop_footer
      %s20 = sadd.s32 1, %s16
    $region7: #{tpu_custom_call.1} parent=1 // loop_footer_branch
      %15 = sbr.rel target = $region3
    $region8: #{tpu_custom_call.1} parent=1 // loop_exit
      _
    %310 = vsyncpa [#allocation4], 1
    %s311 = scalar_lea.sflag [#allocation4], 1
    %312 = vsyncpa %s311, 1
    %313 = vsyncpa [#allocation5], 1
    %s314 = scalar_lea.sflag [#allocation5], 1
    %315 = vsyncpa %s314, 1

</llo_original>
